<compile_context>
chip_gen: v5e
topology: v5e:2x2
jax: 0.10.0
libtpu: 0.0.40
codegen_flags: <defaults>
</compile_context>

<pallas_src>
import functools

import jax
import jax.numpy as jnp
from jax import lax
from jax.experimental import pallas as pl
from jax.experimental.pallas import tpu as pltpu


# ---------------------------------------------------------------------------
# Kernel
# ---------------------------------------------------------------------------
def _se_kernel(x_ref, w1_ref, w2_ref, o_ref):
    """Fused SE block for one batch tile.

    x_ref : (TB, C, HW)   input tile (spatial flattened onto the lane axis)
    w1_ref: (hidden, C)   PyTorch nn.Linear weight layout (out, in)
    w2_ref: (C, hidden)
    o_ref : (TB, C, HW)   output tile
    """
    x = x_ref[...]

    # --- squeeze: global average pool over the spatial (lane) axis -> (TB, C)
    y = jnp.mean(x.astype(jnp.float32), axis=2)

    # --- excitation: two bias-free FC layers (contract the weights' input-
    #     feature axis so the PyTorch layout needs no transpose), ReLU, sigmoid.
    w1 = w1_ref[...].astype(jnp.float32)                       # (hidden, C)
    w2 = w2_ref[...].astype(jnp.float32)                       # (C, hidden)
    h = lax.dot_general(y, w1, (((1,), (1,)), ((), ())),
                        preferred_element_type=jnp.float32)    # (TB, hidden) = y @ w1.T
    h = jnp.maximum(h, 0.0)                                    # ReLU
    s = lax.dot_general(h, w2, (((1,), (1,)), ((), ())),
                        preferred_element_type=jnp.float32)    # (TB, C) = h @ w2.T
    s = jax.nn.sigmoid(s).astype(x.dtype)

    # --- rescale: broadcast multiply along channels, store directly ----------
    o_ref[...] = (x * s[:, :, None]).astype(o_ref.dtype)


# ---------------------------------------------------------------------------
# Wrapper
# ---------------------------------------------------------------------------
_VMEM_LIMIT_BYTES = 48 * 1024 * 1024    # > v5e's 16 MiB default, < v7x's 64 MiB/TC
_BLOCK_BUDGET_BYTES = 24 * 1024 * 1024  # double-buffered in+out blocks + f32 temp


def _choose_batch_tile(B, C, HW, itemsize):
    """Largest divisor TB of B whose pipelined footprint fits the VMEM budget.

    Footprint per sample ~= 2*in + 2*out (double buffering) + 1 f32 pooling
    temp.  Prefer >= 2 grid steps so the batch axis can be split across the two
    v7x TensorCores and the DMA pipeline has work to overlap.
    """
    per_sample = (4 * itemsize + 4) * C * HW
    divisors = [d for d in range(1, B + 1) if B % d == 0]
    fits = [d for d in divisors if d * per_sample <= _BLOCK_BUDGET_BYTES]
    if not fits:
        # TODO(synk): add a two-pass spatially-tiled fallback (pooling kernel +
        # rescale kernel) for feature maps where even one sample overflows VMEM.
        fits = [1]
    pref = [d for d in fits if B // d >= 2] or fits
    return max(pref)


def se_layer(x, w1, w2):
    """SELayer forward.  x: (B, C, H, W); w1: (hidden, C); w2: (C, hidden)."""
    B, C, H, W = x.shape
    hidden = w1.shape[0]
    HW = H * W
    itemsize = jnp.dtype(x.dtype).itemsize

    tb = _choose_batch_tile(B, C, HW, itemsize)
    grid = (B // tb,)

    xk = x.reshape(B, C, HW)          # contiguous -> free reshape, no HBM copy
    blk = (tb, C, HW)                 # last two dims == full array dims -> legal

    out = pl.pallas_call(
        _se_kernel,
        out_shape=jax.ShapeDtypeStruct(xk.shape, x.dtype),
        grid=grid,
        in_specs=[
            pl.BlockSpec(blk, lambda b: (b, 0, 0)),
            pl.BlockSpec((hidden, C), lambda b: (0, 0)),   # weights resident
            pl.BlockSpec((C, hidden), lambda b: (0, 0)),
        ],
        out_specs=pl.BlockSpec(blk, lambda b: (b, 0, 0)),
        compiler_params=pltpu.CompilerParams(
            dimension_semantics=("parallel",),
            vmem_limit_bytes=_VMEM_LIMIT_BYTES,
        ),
    )(xk, w1, w2)

    return out.reshape(B, C, H, W)


# ---------------------------------------------------------------------------
# Pure-JAX reference (mirrors the PyTorch forward)
# ---------------------------------------------------------------------------
def se_layer_ref(x, w1, w2):
    y = jnp.mean(x.astype(jnp.float32), axis=(2, 3))                  # (B, C)
    y = jnp.maximum(y @ w1.T.astype(jnp.float32), 0.0)                # (B, hidden)
    y = jax.nn.sigmoid(y @ w2.T.astype(jnp.float32)).astype(x.dtype)  # (B, C)
    return x * y[:, :, None, None]


if __name__ == "__main__":
    key = jax.random.PRNGKey(0)

    # --- test 1: f32, HW a multiple of 128, batch-tiled grid -----------------
    B, C, H, W, red = 4, 64, 16, 16, 16
    hidden = C // red
    kx, k1, k2, key = jax.random.split(key, 4)
    x = jax.random.normal(kx, (B, C, H, W), dtype=jnp.float32)
    w1 = jax.random.normal(k1, (hidden, C), dtype=jnp.float32) * 0.1   # Linear(C, C//r)
    w2 = jax.random.normal(k2, (C, hidden), dtype=jnp.float32) * 0.1   # Linear(C//r, C)
    out = jax.block_until_ready(se_layer(x, w1, w2))
    ref = se_layer_ref(x, w1, w2)
    assert out.shape == (B, C, H, W)
    assert jnp.allclose(out, ref, atol=1e-5, rtol=1e-5), "f32 mismatch vs reference"

    # --- test 2: bf16, HW = 49 (not 128-aligned), C = 128 --------------------
    B2, C2, H2, W2, red2 = 2, 128, 7, 7, 16
    hidden2 = C2 // red2
    kx, k1, k2, key = jax.random.split(key, 4)
    x2 = jax.random.normal(kx, (B2, C2, H2, W2), dtype=jnp.float32).astype(jnp.bfloat16)
    w1b = jax.random.normal(k1, (hidden2, C2), dtype=jnp.float32) * 0.1
    w2b = jax.random.normal(k2, (C2, hidden2), dtype=jnp.float32) * 0.1
    out2 = jax.block_until_ready(se_layer(x2, w1b, w2b))
    ref2 = se_layer_ref(x2, w1b, w2b)
    assert out2.shape == (B2, C2, H2, W2)
    assert jnp.allclose(out2.astype(jnp.float32), ref2.astype(jnp.float32),
                        atol=2e-2, rtol=2e-2), "bf16 mismatch vs reference"

    print("KERNEL_OK")
</pallas_src>

<mosaic_0001>
module attributes {stable_mosaic.version = 11 : i64} {
  func.func @_se_kernel(%arg0: i32, %arg1: memref<2x64x256xf32, #tpu.memory_space<vmem>>, %arg2: memref<4x64xf32, #tpu.memory_space<vmem>>, %arg3: memref<64x4xf32, #tpu.memory_space<vmem>>, %arg4: memref<2x64x256xf32, #tpu.memory_space<vmem>>) attributes {dimension_semantics = [#tpu.dimension_semantics<parallel>], iteration_bounds = array<i64: 2>, scalar_prefetch = 0 : i64, scratch_operands = 0 : i64, tpu.core_type = #tpu.core_type<tc>, window_params = [{transform_indices = @transform_0, window_bounds = array<i64: 2, 64, 256>}, {pipeline_mode = #tpu.pipeline_mode<synchronous>, transform_indices = @transform_1, window_bounds = array<i64: 4, 64>}, {pipeline_mode = #tpu.pipeline_mode<synchronous>, transform_indices = @transform_2, window_bounds = array<i64: 64, 4>}, {transform_indices = @transform_3, window_bounds = array<i64: 2, 64, 256>}]} {
    %c0 = arith.constant 0 : index
    %c0_0 = arith.constant 0 : index
    %c0_1 = arith.constant 0 : index
    %0 = vector.load %arg1[%c0, %c0_0, %c0_1] : memref<2x64x256xf32, #tpu.memory_space<vmem>>, vector<2x64x256xf32>
    %cst = arith.constant dense<0.000000e+00> : vector<2x64xf32>
    %1 = vector.multi_reduction <add>, %0, %cst [2] : vector<2x64x256xf32> to vector<2x64xf32>
    %cst_2 = arith.constant 2.560000e+02 : f32
    %2 = vector.broadcast %cst_2 : f32 to vector<2x64xf32>
    %3 = arith.divf %1, %2 : vector<2x64xf32>
    %c0_3 = arith.constant 0 : index
    %c0_4 = arith.constant 0 : index
    %4 = vector.load %arg2[%c0_3, %c0_4] : memref<4x64xf32, #tpu.memory_space<vmem>>, vector<4x64xf32>
    %c0_5 = arith.constant 0 : index
    %c0_6 = arith.constant 0 : index
    %5 = vector.load %arg3[%c0_5, %c0_6] : memref<64x4xf32, #tpu.memory_space<vmem>>, vector<64x4xf32>
    %cst_7 = arith.constant dense<0.000000e+00> : vector<2x4xf32>
    %6 = tpu.matmul %3, %4, %cst_7 {dimension_numbers = #tpu.dot_dimension_numbers<[1], [1], [0], [0], [0, 0, 1, 0], [], []>} : vector<2x64xf32>, vector<4x64xf32>, vector<2x4xf32> -> vector<2x4xf32>
    %cst_8 = arith.constant 0.000000e+00 : f32
    %7 = vector.broadcast %cst_8 : f32 to vector<2x4xf32>
    %8 = arith.maximumf %6, %7 : vector<2x4xf32>
    %cst_9 = arith.constant dense<0.000000e+00> : vector<2x64xf32>
    %9 = tpu.matmul %8, %5, %cst_9 {dimension_numbers = #tpu.dot_dimension_numbers<[1], [1], [0], [0], [0, 0, 1, 0], [], []>} : vector<2x4xf32>, vector<64x4xf32>, vector<2x64xf32> -> vector<2x64xf32>
    %10 = arith.negf %9 : vector<2x64xf32>
    %11 = math.exp %10 : vector<2x64xf32>
    %cst_10 = arith.constant 1.000000e+00 : f32
    %12 = vector.broadcast %cst_10 : f32 to vector<2x64xf32>
    %13 = arith.addf %12, %11 : vector<2x64xf32>
    %14 = arith.divf %12, %13 : vector<2x64xf32>
    %15 = vector.shape_cast %14 : vector<2x64xf32> to vector<2x64x1xf32>
    %16 = vector.broadcast %15 : vector<2x64x1xf32> to vector<2x64x256xf32>
    %17 = arith.mulf %0, %16 : vector<2x64x256xf32>
    %c0_11 = arith.constant 0 : index
    %c0_12 = arith.constant 0 : index
    %c0_13 = arith.constant 0 : index
    %18 = vector.load %arg4[%c0_11, %c0_12, %c0_13] : memref<2x64x256xf32, #tpu.memory_space<vmem>>, vector<2x64x256xf32>
    tpu.vector_store %arg4[%c0_11, %c0_12, %c0_13], %17 {strides = array<i32>} : memref<2x64x256xf32, #tpu.memory_space<vmem>>, vector<2x64x256xf32>,
    return
  }
  func.func @transform_0(%arg0: i32) -> (i32, i32, i32) {
    %c0_i32 = arith.constant 0 : i32
    %c0_i32_0 = arith.constant 0 : i32
    %c0_i32_1 = arith.constant 0 : i32
    return %arg0, %c0_i32, %c0_i32_0 : i32, i32, i32
  }
  func.func @transform_1(%arg0: i32) -> (i32, i32) {
    %c0_i32 = arith.constant 0 : i32
    %c0_i32_0 = arith.constant 0 : i32
    %c0_i32_1 = arith.constant 0 : i32
    return %c0_i32, %c0_i32_0 : i32, i32
  }
  func.func @transform_2(%arg0: i32) -> (i32, i32) {
    %c0_i32 = arith.constant 0 : i32
    %c0_i32_0 = arith.constant 0 : i32
    %c0_i32_1 = arith.constant 0 : i32
    return %c0_i32, %c0_i32_0 : i32, i32
  }
  func.func @transform_3(%arg0: i32) -> (i32, i32, i32) {
    %c0_i32 = arith.constant 0 : i32
    %c0_i32_0 = arith.constant 0 : i32
    %c0_i32_1 = arith.constant 0 : i32
    return %arg0, %c0_i32, %c0_i32_0 : i32, i32, i32
  }
}

</mosaic_0001>

<llo_original>
// kernel: tpu_custom_call.1
$region0: #{tpu_custom_call.1}
  #allocation0 [shape = 'u32[]', space=smem, size = 0x4, offset = 0x4, fixed_abs, tag = 'smem constant byte address 0x4 - core index']
  #allocation1 [shape = 'u32[72,128]{1,0:T(1,128)}', space=vmem, size = 0x9000, scoped, tag = 'internal scratch']
  %s0 = inlined_call_operand.hbm [shape: f32[4,64,256], index: 0, kind: input, shape index: {}]
  %s1 = inlined_call_operand.vmem [shape: f32[4,64], index: 1, kind: input, shape index: {}]
  %s2 = inlined_call_operand.vmem [shape: f32[64,4], index: 2, kind: input, shape index: {}]
  %s3 = inlined_call_operand.hbm [shape: f32[4,64,256], index: 3, kind: output, shape index: {}]
  %s4 = sld [smem:[#allocation0]]
  $region49: #{tpu_custom_call.1} parent=0
    _
  %s6 = ssub.s32 1, %s4
  %s7 = scalar_select 0, %s6, %s4
  $region1: #{tpu_custom_call.1} parent=0
    #allocation2 [shape = 'u8[262144]{0}', space=vmem, size = 0x40000, scoped, tag = 'input window, operand 0']
    #allocation3 [shape = 's32[2]{0}', space=sflag, size = 0x8, scoped, tag = 'scoped memory for tpu_custom_call.1']
    #allocation4 [shape = 's32[2]{0}', space=sflag, size = 0x8, scoped, tag = 'scoped memory for tpu_custom_call.1']
    #allocation5 [shape = 'u8[262144]{0}', space=vmem, size = 0x40000, scoped, tag = 'output window, operand 0']
    %8 = vsyncpa [#allocation3], 0
    %s9 = scalar_lea.sflag [#allocation3], 1
    %10 = vsyncpa %s9, 0
    %11 = vsyncpa [#allocation4], 0
    %s12 = scalar_lea.sflag [#allocation4], 1
    %13 = vsyncpa %s12, 0
    loop: start=0, step=1, limit=4
    $region2: #{tpu_custom_call.1} parent=1 // loop_pre_header
      _
    $region3: #{tpu_custom_call.1} parent=1 // loop_header
      %s15 = sphi 0, %s19
      %p16 = scmp.ge.s32.totalorder %s15, 4
      %s25 = sphi 0, %s27
      %s28 = sphi 0, %s25
      %s29 = sphi 0, %s28
      %s45 = sphi 0, %s29
      %s49 = sphi 0, %s49
      %s51 = sphi 0, %s49
      %s52 = sphi 0, %s51
      %s66 = sphi 0, %s52
      %s70 = sphi 0, %s70
      %s72 = sphi 0, %s70
      %s73 = sphi 0, %s72
      %s87 = sphi 0, %s73
      %s93 = sphi 0, %s95
      %s96 = sphi 0, %s93
      %s97 = sphi 0, %s96
      %s113 = sphi 0, %s97
    $region4: #{tpu_custom_call.1} parent=1 // loop_header_branch
      %18 = sbr.rel (%p16) target = $region8
    $region5: #{tpu_custom_call.1} parent=1 // loop_body
      %s20 = ssub.s32 %s15, 1
      %s21 = ssub.s32 %s15, 2
      %s22 = sadd.s32 %s15, 1
      %s23 = ssub.s32 %s15, %s22
      %p24 = scmp.eq.s32.totalorder %s23, 0
      %s26 = sadd.s32 %s25, 1
      %s27 = scalar_select %p24, %s25, %s26
      %p30 = pneg %p24
      %p31 = scmp.eq.s32.totalorder %s15, 1
      %p32 = por %p30, %p31
      %p33 = scmp.ne.s32.totalorder %s25, %s28
      %p34 = scmp.eq.s32.totalorder %s15, 0
      %p35 = por %p33, %p34
      %p36 = scmp.ne.s32.totalorder %s25, %s28
      %p37 = scmp.eq.s32.totalorder %s20, 1
      %p38 = por %p36, %p37
      %p39 = scmp.ne.s32.totalorder %s28, %s29
      %p40 = scmp.eq.s32.totalorder %s20, 0
      %p41 = por %p39, %p40
      %p42 = scmp.ne.s32.totalorder %s28, %s29
      %p43 = scmp.eq.s32.totalorder %s21, 1
      %p44 = por %p42, %p43
      %p46 = scmp.ne.s32.totalorder %s29, %s45
      %p47 = scmp.eq.s32.totalorder %s21, 0
      %p48 = por %p46, %p47
      %s50 = sadd.s32 %s49, 1
      %p53 = scmp.eq.s32.totalorder %s15, 1
      %p54 = scmp.ne.s32.totalorder %s49, %s51
      %p55 = scmp.eq.s32.totalorder %s15, 0
      %p56 = por %p54, %p55
      %p57 = scmp.ne.s32.totalorder %s49, %s51
      %p58 = scmp.eq.s32.totalorder %s20, 1
      %p59 = por %p57, %p58
      %p60 = scmp.ne.s32.totalorder %s51, %s52
      %p61 = scmp.eq.s32.totalorder %s20, 0
      %p62 = por %p60, %p61
      %p63 = scmp.ne.s32.totalorder %s51, %s52
      %p64 = scmp.eq.s32.totalorder %s21, 1
      %p65 = por %p63, %p64
      %p67 = scmp.ne.s32.totalorder %s52, %s66
      %p68 = scmp.eq.s32.totalorder %s21, 0
      %p69 = por %p67, %p68
      %s71 = sadd.s32 %s70, 1
      %p74 = scmp.eq.s32.totalorder %s15, 1
      %p75 = scmp.ne.s32.totalorder %s70, %s72
      %p76 = scmp.eq.s32.totalorder %s15, 0
      %p77 = por %p75, %p76
      %p78 = scmp.ne.s32.totalorder %s70, %s72
      %p79 = scmp.eq.s32.totalorder %s20, 1
      %p80 = por %p78, %p79
      %p81 = scmp.ne.s32.totalorder %s72, %s73
      %p82 = scmp.eq.s32.totalorder %s20, 0
      %p83 = por %p81, %p82
      %p84 = scmp.ne.s32.totalorder %s72, %s73
      %p85 = scmp.eq.s32.totalorder %s21, 1
      %p86 = por %p84, %p85
      %p88 = scmp.ne.s32.totalorder %s73, %s87
      %p89 = scmp.eq.s32.totalorder %s21, 0
      %p90 = por %p88, %p89
      %s91 = ssub.s32 %s15, %s22
      %p92 = scmp.eq.s32.totalorder %s91, 0
      %s94 = sadd.s32 %s93, 1
      %s95 = scalar_select %p92, %s93, %s94
      %p98 = pneg %p92
      %p99 = scmp.eq.s32.totalorder %s15, 1
      %p100 = por %p98, %p99
      %p101 = scmp.ne.s32.totalorder %s93, %s96
      %p102 = scmp.eq.s32.totalorder %s15, 0
      %p103 = por %p101, %p102
      %p104 = scmp.ne.s32.totalorder %s93, %s96
      %p105 = scmp.eq.s32.totalorder %s20, 1
      %p106 = por %p104, %p105
      %p107 = scmp.ne.s32.totalorder %s96, %s97
      %p108 = scmp.eq.s32.totalorder %s20, 0
      %p109 = por %p107, %p108
      %p110 = scmp.ne.s32.totalorder %s96, %s97
      %p111 = scmp.eq.s32.totalorder %s21, 1
      %p112 = por %p110, %p111
      %p114 = scmp.ne.s32.totalorder %s97, %s113
      %p115 = scmp.eq.s32.totalorder %s21, 0
      %p116 = por %p114, %p115
      %p117 = scmp.le.s32.totalorder 1, %s15
      %p118 = scmp.lt.s32.totalorder %s15, 3
      %p119 = pnand %p117, %p118
      %p120 = pneg %p119
      // Predicated region
      $region9: #{tpu_custom_call.1} parent=5 // pred_check
        _
      $region10: #{tpu_custom_call.1} parent=5 // pred_check_branch
        %122 = sbr.rel (%p119) target = $region12
      $region11: #{tpu_custom_call.1} parent=5 // pred_region
        %s123 = ssub.s32 %s15, 1
        // Predicated region
        $region13: #{tpu_custom_call.1} parent=11 // pred_check
          %p124 = pneg %p62
        $region14: #{tpu_custom_call.1} parent=11 // pred_check_branch
          %126 = sbr.rel (%p124) target = $region16
        $region15: #{tpu_custom_call.1} parent=11 // pred_region
          _
        $region16: #{tpu_custom_call.1} parent=11 // pred_fallthru
          _
        // Predicated region
        $region17: #{tpu_custom_call.1} parent=11 // pred_check
          %p127 = pneg %p83
        $region18: #{tpu_custom_call.1} parent=11 // pred_check_branch
          %129 = sbr.rel (%p127) target = $region20
        $region19: #{tpu_custom_call.1} parent=11 // pred_region
          _
        $region20: #{tpu_custom_call.1} parent=11 // pred_fallthru
          _
      $region12: #{tpu_custom_call.1} parent=5 // pred_fallthru
        _
      %p130 = scmp.lt.s32.totalorder %s15, 2
      // Predicated region
      $region21: #{tpu_custom_call.1} parent=5 // pred_check
        %p131 = pneg %p130
      $region22: #{tpu_custom_call.1} parent=5 // pred_check_branch
        %133 = sbr.rel (%p131) target = $region24
      $region23: #{tpu_custom_call.1} parent=5 // pred_region
        // Predicated region
        $region25: #{tpu_custom_call.1} parent=23 // pred_check
          %p134 = pneg %p35
        $region26: #{tpu_custom_call.1} parent=23 // pred_check_branch
          %136 = sbr.rel (%p134) target = $region28
        $region27: #{tpu_custom_call.1} parent=23 // pred_region
          %s137 = sand.u32 %s25, 1
          %s138 = scalar_lea.sflag [#allocation3], %s137
          %s139 = sand.u32 %s25, 1
          %s140 = smul.addr %s139, 256
          %s141 = scalar_lea.vmem [#allocation2], %s140
          %s142 = smul.u32 2, %s15
          %144 = vsyncadd %s138, 0
          %s145 = smul.addr %s142, 16
          %s146 = smul.addr %s145, 8
          %s147 = scalar_lea.hbm %s0, %s146
          %s148 = sshll.u32 %s147, 4
          %s149 = int_to_ptr.hbm [resolvable:$true] %s148
          %s150 = sshll.u32 %s141, 4
          %s151 = int_to_ptr.vmem [resolvable:$true] %s150
          %156 = dma.hbm_to_vmem [thread:$0]  %s149, 4096, %s151, %s138, 256, 256, 16
        $region28: #{tpu_custom_call.1} parent=23 // pred_fallthru
          _
      $region24: #{tpu_custom_call.1} parent=5 // pred_fallthru
        _
      %p157 = scmp.le.s32.totalorder 1, %s15
      %p158 = scmp.lt.s32.totalorder %s15, 3
      %p159 = pnand %p157, %p158
      %p160 = pneg %p159
      // Predicated region
      $region29: #{tpu_custom_call.1} parent=5 // pred_check
        _
      $region30: #{tpu_custom_call.1} parent=5 // pred_check_branch
        %162 = sbr.rel (%p159) target = $region32
      $region31: #{tpu_custom_call.1} parent=5 // pred_region
        %s163 = ssub.s32 %s15, 1
        %s164 = sand.u32 %s28, 1
        %s165 = scalar_lea.sflag [#allocation3], %s164
        %s166 = sand.u32 %s28, 1
        %s167 = smul.addr %s166, 256
        %s168 = scalar_lea.vmem [#allocation2], %s167
        // Predicated region
        $region33: #{tpu_custom_call.1} parent=31 // pred_check
          %p169 = pneg %p41
        $region34: #{tpu_custom_call.1} parent=31 // pred_check_branch
          %171 = sbr.rel (%p169) target = $region36
        $region35: #{tpu_custom_call.1} parent=31 // pred_region
          %173 = dma.done %s165, 4096
        $region36: #{tpu_custom_call.1} parent=31 // pred_fallthru
          _
        %s174 = sand.u32 %s28, 1
        %s175 = scalar_lea.sflag [#allocation3], %s174
        %s176 = sand.u32 %s28, 1
        %s177 = smul.addr %s176, 256
        %s178 = scalar_lea.vmem [#allocation2], %s177
        %p179 = pneg %p41
        %p180 = pneg %p38
        %p181 = pneg %p62
        %p182 = pneg %p59
        %p183 = pneg %p83
        %p184 = pneg %p80
        %p185 = pneg %p109
        %p186 = pneg %p106
        %s187 = sand.u32 %s96, 1
        %s188 = scalar_lea.sflag [#allocation4], %s187
        %s189 = sand.u32 %s96, 1
        %s190 = smul.addr %s189, 256
        %s191 = scalar_lea.vmem [#allocation5], %s190
        %s192 = smul.u32 2, %s20
        %s193 = smul.u32 2, %s20
        %v194 = vld [vmem:[%s168] sm:$0xff]
        %v195 = vld [vmem:[%s168 + $0x8] sm:$0xff]
        %v196 = vld [vmem:[%s168 + $0x10] sm:$0xff]
        %v197 = vld [vmem:[%s168 + $0x18] sm:$0xff]
        %v198 = vld [vmem:[%s168 + $0x20] sm:$0xff]
        %v199 = vld [vmem:[%s168 + $0x28] sm:$0xff]
        %v200 = vld [vmem:[%s168 + $0x30] sm:$0xff]
        %v201 = vld [vmem:[%s168 + $0x38] sm:$0xff]
        %v202 = vld [vmem:[%s168 + $0x40] sm:$0xff]
        %v203 = vld [vmem:[%s168 + $0x48] sm:$0xff]
        %v204 = vld [vmem:[%s168 + $0x50] sm:$0xff]
        %v205 = vld [vmem:[%s168 + $0x58] sm:$0xff]
        %v206 = vld [vmem:[%s168 + $0x60] sm:$0xff]
        %v207 = vld [vmem:[%s168 + $0x68] sm:$0xff]
        %v208 = vld [vmem:[%s168 + $0x70] sm:$0xff]
        %v209 = vld [vmem:[%s168 + $0x78] sm:$0xff]
        %v210 = vld [vmem:[%s168 + $0x80] sm:$0xff]
        %v211 = vld [vmem:[%s168 + $0x88] sm:$0xff]
        %v212 = vld [vmem:[%s168 + $0x90] sm:$0xff]
        %v213 = vld [vmem:[%s168 + $0x98] sm:$0xff]
        %v214 = vld [vmem:[%s168 + $0xa0] sm:$0xff]
        %v215 = vld [vmem:[%s168 + $0xa8] sm:$0xff]
        %v216 = vld [vmem:[%s168 + $0xb0] sm:$0xff]
        %v217 = vld [vmem:[%s168 + $0xb8] sm:$0xff]
        %v218 = vld [vmem:[%s168 + $0xc0] sm:$0xff]
        %v219 = vld [vmem:[%s168 + $0xc8] sm:$0xff]
        %v220 = vld [vmem:[%s168 + $0xd0] sm:$0xff]
        %v221 = vld [vmem:[%s168 + $0xd8] sm:$0xff]
        %v222 = vld [vmem:[%s168 + $0xe0] sm:$0xff]
        %v223 = vld [vmem:[%s168 + $0xe8] sm:$0xff]
        %v224 = vld [vmem:[%s168 + $0xf0] sm:$0xff]
        %v225 = vld [vmem:[%s168 + $0xf8] sm:$0xff]
        %v226 = vadd.f32 %v194, %v195
        %227 = vadd.xlane.f32.xlu0 %v226
        %v228 = vpop.xlane.xlu0 %227
        %v229 = vadd.f32 %v196, %v197
        %230 = vadd.xlane.f32.xlu0 %v229
        %v231 = vpop.xlane.xlu0 %230
        %v232 = vadd.f32 %v198, %v199
        %233 = vadd.xlane.f32.xlu0 %v232
        %v234 = vpop.xlane.xlu0 %233
        %v235 = vadd.f32 %v200, %v201
        %236 = vadd.xlane.f32.xlu0 %v235
        %v237 = vpop.xlane.xlu0 %236
        %v238 = vadd.f32 %v202, %v203
        %239 = vadd.xlane.f32.xlu0 %v238
        %v240 = vpop.xlane.xlu0 %239
        %v241 = vadd.f32 %v204, %v205
        %242 = vadd.xlane.f32.xlu0 %v241
        %v243 = vpop.xlane.xlu0 %242
        %v244 = vadd.f32 %v206, %v207
        %245 = vadd.xlane.f32.xlu0 %v244
        %v246 = vpop.xlane.xlu0 %245
        %v247 = vadd.f32 %v208, %v209
        %248 = vadd.xlane.f32.xlu0 %v247
        %v249 = vpop.xlane.xlu0 %248
        %v250 = vadd.f32 %v210, %v211
        %251 = vadd.xlane.f32.xlu0 %v250
        %v252 = vpop.xlane.xlu0 %251
        %v253 = vadd.f32 %v212, %v213
        %254 = vadd.xlane.f32.xlu0 %v253
        %v255 = vpop.xlane.xlu0 %254
        %v256 = vadd.f32 %v214, %v215
        %257 = vadd.xlane.f32.xlu0 %v256
        %v258 = vpop.xlane.xlu0 %257
        %v259 = vadd.f32 %v216, %v217
        %260 = vadd.xlane.f32.xlu0 %v259
        %v261 = vpop.xlane.xlu0 %260
        %v262 = vadd.f32 %v218, %v219
        %263 = vadd.xlane.f32.xlu0 %v262
        %v264 = vpop.xlane.xlu0 %263
        %v265 = vadd.f32 %v220, %v221
        %266 = vadd.xlane.f32.xlu0 %v265
        %v267 = vpop.xlane.xlu0 %266
        %v268 = vadd.f32 %v222, %v223
        %269 = vadd.xlane.f32.xlu0 %v268
        %v270 = vpop.xlane.xlu0 %269
        %v271 = vadd.f32 %v224, %v225
        %272 = vadd.xlane.f32.xlu0 %v271
        %v273 = vpop.xlane.xlu0 %272
        %v274 = vrcp.pop 256.0
        %v275 = vmul.f32 256.0, %v274
        %v276 = vsub.f32 1.0, %v275
        %v277 = vmul.f32 %v274, %v276
        %v278 = vadd.f32 %v274, %v277
        %vm279 = vweird.f32 %v274
        %v280 = vsel %vm279, %v274, %v278
        %v281 = vmul.f32 %v228, %v280
        %v282 = vmul.f32 %v231, %v280
        %v283 = vmul.f32 %v234, %v280
        %v284 = vmul.f32 %v237, %v280
        %v285 = vmul.f32 %v240, %v280
        %v286 = vmul.f32 %v243, %v280
        %v287 = vmul.f32 %v246, %v280
        %v288 = vmul.f32 %v249, %v280
        %v289 = vmul.f32 %v252, %v280
        %v290 = vmul.f32 %v255, %v280
        %v291 = vmul.f32 %v258, %v280
        %v292 = vmul.f32 %v261, %v280
        %v293 = vmul.f32 %v264, %v280
        %v294 = vmul.f32 %v267, %v280
        %v295 = vmul.f32 %v270, %v280
        %v296 = vmul.f32 %v273, %v280
        %v297 = vld [vmem:[%s1] sm:$0xf]
        %v298 = vld [vmem:[%s2] sm:$0xff]
        %v299 = vld [vmem:[%s2 + $0x8] sm:$0xff]
        %v300 = vld [vmem:[%s2 + $0x10] sm:$0xff]
        %v301 = vld [vmem:[%s2 + $0x18] sm:$0xff]
        %v302 = vld [vmem:[%s2 + $0x20] sm:$0xff]
        %v303 = vld [vmem:[%s2 + $0x28] sm:$0xff]
        %v304 = vld [vmem:[%s2 + $0x30] sm:$0xff]
        %v305 = vld [vmem:[%s2 + $0x38] sm:$0xff]
        %v322 = vlaneseq
        %v323 = vand.u32 %v322, 127
        %v324 = vperm.slane %v281, %v323
        %v325 = vadd.s32 %v323, 4294967288
        %v326 = vperm.slane %v282, %v325
        %vm327 = vcmask 130112
        %v328 = vsel %vm327, %v326, %v324
        %v329 = vadd.s32 %v323, 4294967280
        %v330 = vperm.slane %v283, %v329
        %vm331 = vcmask 195712
        %v332 = vsel %vm331, %v330, %v328
        %v333 = vadd.s32 %v323, 4294967272
        %v334 = vperm.slane %v284, %v333
        %vm335 = vcmask 261312
        %v336 = vsel %vm335, %v334, %v332
        %v337 = vadd.s32 %v323, 4294967264
        %v338 = vperm.slane %v285, %v337
        %vm339 = vcmask 326912
        %v340 = vsel %vm339, %v338, %v336
        %v341 = vadd.s32 %v323, 4294967256
        %v342 = vperm.slane %v286, %v341
        %vm343 = vcmask 392512
        %v344 = vsel %vm343, %v342, %v340
        %v345 = vadd.s32 %v323, 4294967248
        %v346 = vperm.slane %v287, %v345
        %vm347 = vcmask 458112
        %v348 = vsel %vm347, %v346, %v344
        %v349 = vadd.s32 %v323, 4294967240
        %v350 = vperm.slane %v288, %v349
        %vm351 = vcmask 523712
        %v352 = vsel %vm351, %v350, %v348
        %v353 = vperm.slane %v289, %v323
        %v354 = vperm.slane %v290, %v325
        %v355 = vsel %vm327, %v354, %v353
        %v356 = vperm.slane %v291, %v329
        %v357 = vsel %vm331, %v356, %v355
        %v358 = vperm.slane %v292, %v333
        %v359 = vsel %vm335, %v358, %v357
        %v360 = vperm.slane %v293, %v337
        %v361 = vsel %vm339, %v360, %v359
        %v362 = vperm.slane %v294, %v341
        %v363 = vsel %vm343, %v362, %v361
        %v364 = vperm.slane %v295, %v345
        %v365 = vsel %vm347, %v364, %v363
        %v366 = vperm.slane %v296, %v349
        %v367 = vsel %vm351, %v366, %v365
        %vm368 = vcmask 1041409
        %v369 = vsel %vm368, %v367, %v352
        %vm370 = vcmask 523264
        %v371 = vsel %vm370, %v369, 0
        %v374 = vsel %vm370, %v297, 0
        %376 = vmatpush.xpose.msra.mxu0 0.0
        %377 = vmatpush.xpose.msra.mxu0 0.0
        %378 = vmatpush.xpose.msra.mxu0 0.0
        %379 = vmatpush.xpose.msra.mxu0 0.0
        %380 = vmatpush.xpose.msra.mxu0 0.0
        %381 = vmatpush.xpose.msra.mxu0 0.0
        %382 = vmatpush.xpose.msra.mxu0 0.0
        %383 = vmatpush.xpose.msra.mxu0 0.0
        %384 = vmatpush.xpose.msra.mxu0 0.0
        %385 = vmatpush.xpose.msra.mxu0 0.0
        %386 = vmatpush.xpose.msra.mxu0 0.0
        %387 = vmatpush.xpose.msra.mxu0 0.0
        %388 = vmatpush.xpose.msra.mxu0 0.0
        %389 = vmatpush.xpose.msra.mxu0 0.0
        %390 = vmatpush.xpose.msra.mxu0 0.0
        %391 = vmatpush.xpose.msra.mxu0 %v374
        %392 = vmatmul.f32.gmra.mxu0 %v371
        %v393 = vpop.f32.mrf.mxu0
        %v394 = vadd.f32 0.0, %v393
        %395 = vdwg.mxu0
        %v396 = vmax.f32 %v394, 0.0
        %vm397 = vcmask 31744
        %v399 = vsel %vm397, %v396, 0
        %v402 = vsel %vm397, %v298, 0
        %v405 = vsel %vm397, %v299, 0
        %v408 = vsel %vm397, %v300, 0
        %v411 = vsel %vm397, %v301, 0
        %v414 = vsel %vm397, %v302, 0
        %v417 = vsel %vm397, %v303, 0
        %v420 = vsel %vm397, %v304, 0
        %v423 = vsel %vm397, %v305, 0
        %425 = vmatpush.xpose.msra.mxu0 0.0
        %426 = vmatpush.xpose.msra.mxu0 0.0
        %427 = vmatpush.xpose.msra.mxu0 0.0
        %428 = vmatpush.xpose.msra.mxu0 0.0
        %429 = vmatpush.xpose.msra.mxu0 0.0
        %430 = vmatpush.xpose.msra.mxu0 0.0
        %431 = vmatpush.xpose.msra.mxu0 0.0
        %432 = vmatpush.xpose.msra.mxu0 0.0
        %433 = vmatpush.xpose.msra.mxu0 %v423
        %434 = vmatpush.xpose.msra.mxu0 %v420
        %435 = vmatpush.xpose.msra.mxu0 %v417
        %436 = vmatpush.xpose.msra.mxu0 %v414
        %437 = vmatpush.xpose.msra.mxu0 %v411
        %438 = vmatpush.xpose.msra.mxu0 %v408
        %439 = vmatpush.xpose.msra.mxu0 %v405
        %440 = vmatpush.xpose.msra.mxu0 %v402
        %441 = vmatmul.f32.gmra.mxu0 %v399
        %v442 = vpop.f32.mrf.mxu0
        %v443 = vadd.f32 0.0, %v442
        %444 = vdwg.mxu0
        %v445 = vxor.u32 %v443, 2147483648
        %v446 = vmul.f32 %v445, 1.442695
        %v447 = vpow.pop %v446
        %v448 = vadd.f32 %v447, 1.0
        %v449 = vrcp.pop %v448
        %v450 = vmul.f32 %v448, %v449
        %v451 = vsub.f32 1.0, %v450
        %v452 = vmul.f32 %v449, %v451
        %v453 = vadd.f32 %v449, %v452
        %vm454 = vweird.f32 %v448
        %vm455 = vweird.f32 %v449
        %vm456 = vmor %vm454, %vm455
        %v457 = vsel %vm456, %v449, %v453
        %v458 = vand.u32 2147483647, %v448
        %vm459 = vcmp.eq.f32.partialorder %v458, 8.507059e+37
        %v460 = vand.u32 %v448, 2147483648
        %v461 = vor.u32 1.1754944e-38, %v460
        %v462 = vsel %vm459, %v461, %v457
        %v463 = vmul.f32 1.0, %v462
        %v464 = vperm.slane %v463, 0
        %v465 = vlaneseq
        %v466 = vshrl.u32 %v465, 7
        %468 = vset.pattern.permute.xlu0 %v466
        %469 = vperm.xlu0 %468, %v464
        %v470 = vpop.permute.xlu0 %469
        %v471 = vlaneseq
        %v472 = vshrl.u32 %v471, 7
        %v473 = vadd.s32 %v472, 8
        %474 = vset.pattern.permute.xlu0 %v473
        %475 = vperm.xlu0 %474, %v464
        %v476 = vpop.permute.xlu0 %475
        %v477 = vlaneseq
        %v478 = vshrl.u32 %v477, 7
        %v479 = vadd.s32 %v478, 16
        %480 = vset.pattern.permute.xlu0 %v479
        %481 = vperm.xlu0 %480, %v464
        %v482 = vpop.permute.xlu0 %481
        %v483 = vlaneseq
        %v484 = vshrl.u32 %v483, 7
        %v485 = vadd.s32 %v484, 24
        %486 = vset.pattern.permute.xlu0 %v485
        %487 = vperm.xlu0 %486, %v464
        %v488 = vpop.permute.xlu0 %487
        %v489 = vlaneseq
        %v490 = vshrl.u32 %v489, 7
        %v491 = vadd.s32 %v490, 32
        %492 = vset.pattern.permute.xlu0 %v491
        %493 = vperm.xlu0 %492, %v464
        %v494 = vpop.permute.xlu0 %493
        %v495 = vlaneseq
        %v496 = vshrl.u32 %v495, 7
        %v497 = vadd.s32 %v496, 40
        %498 = vset.pattern.permute.xlu0 %v497
        %499 = vperm.xlu0 %498, %v464
        %v500 = vpop.permute.xlu0 %499
        %v501 = vlaneseq
        %v502 = vshrl.u32 %v501, 7
        %v503 = vadd.s32 %v502, 48
        %504 = vset.pattern.permute.xlu0 %v503
        %505 = vperm.xlu0 %504, %v464
        %v506 = vpop.permute.xlu0 %505
        %v507 = vlaneseq
        %v508 = vshrl.u32 %v507, 7
        %v509 = vadd.s32 %v508, 56
        %510 = vset.pattern.permute.xlu0 %v509
        %511 = vperm.xlu0 %510, %v464
        %v512 = vpop.permute.xlu0 %511
        %v513 = vperm.slane %v463, 1
        %v514 = vlaneseq
        %v515 = vshrl.u32 %v514, 7
        %517 = vset.pattern.permute.xlu0 %v515
        %518 = vperm.xlu0 %517, %v513
        %v519 = vpop.permute.xlu0 %518
        %v520 = vlaneseq
        %v521 = vshrl.u32 %v520, 7
        %v522 = vadd.s32 %v521, 8
        %523 = vset.pattern.permute.xlu0 %v522
        %524 = vperm.xlu0 %523, %v513
        %v525 = vpop.permute.xlu0 %524
        %v526 = vlaneseq
        %v527 = vshrl.u32 %v526, 7
        %v528 = vadd.s32 %v527, 16
        %529 = vset.pattern.permute.xlu0 %v528
        %530 = vperm.xlu0 %529, %v513
        %v531 = vpop.permute.xlu0 %530
        %v532 = vlaneseq
        %v533 = vshrl.u32 %v532, 7
        %v534 = vadd.s32 %v533, 24
        %535 = vset.pattern.permute.xlu0 %v534
        %536 = vperm.xlu0 %535, %v513
        %v537 = vpop.permute.xlu0 %536
        %v538 = vlaneseq
        %v539 = vshrl.u32 %v538, 7
        %v540 = vadd.s32 %v539, 32
        %541 = vset.pattern.permute.xlu0 %v540
        %542 = vperm.xlu0 %541, %v513
        %v543 = vpop.permute.xlu0 %542
        %v544 = vlaneseq
        %v545 = vshrl.u32 %v544, 7
        %v546 = vadd.s32 %v545, 40
        %547 = vset.pattern.permute.xlu0 %v546
        %548 = vperm.xlu0 %547, %v513
        %v549 = vpop.permute.xlu0 %548
        %v550 = vlaneseq
        %v551 = vshrl.u32 %v550, 7
        %v552 = vadd.s32 %v551, 48
        %553 = vset.pattern.permute.xlu0 %v552
        %554 = vperm.xlu0 %553, %v513
        %v555 = vpop.permute.xlu0 %554
        %v556 = vlaneseq
        %v557 = vshrl.u32 %v556, 7
        %v558 = vadd.s32 %v557, 56
        %559 = vset.pattern.permute.xlu0 %v558
        %560 = vperm.xlu0 %559, %v513
        %v561 = vpop.permute.xlu0 %560
        %v562 = vmul.f32 %v194, %v470
        %v563 = vmul.f32 %v195, %v470
        %v564 = vmul.f32 %v196, %v476
        %v565 = vmul.f32 %v197, %v476
        %v566 = vmul.f32 %v198, %v482
        %v567 = vmul.f32 %v199, %v482
        %v568 = vmul.f32 %v200, %v488
        %v569 = vmul.f32 %v201, %v488
        %v570 = vmul.f32 %v202, %v494
        %v571 = vmul.f32 %v203, %v494
        %v572 = vmul.f32 %v204, %v500
        %v573 = vmul.f32 %v205, %v500
        %v574 = vmul.f32 %v206, %v506
        %v575 = vmul.f32 %v207, %v506
        %v576 = vmul.f32 %v208, %v512
        %v577 = vmul.f32 %v209, %v512
        %v578 = vmul.f32 %v210, %v519
        %v579 = vmul.f32 %v211, %v519
        %v580 = vmul.f32 %v212, %v525
        %v581 = vmul.f32 %v213, %v525
        %v582 = vmul.f32 %v214, %v531
        %v583 = vmul.f32 %v215, %v531
        %v584 = vmul.f32 %v216, %v537
        %v585 = vmul.f32 %v217, %v537
        %v586 = vmul.f32 %v218, %v543
        %v587 = vmul.f32 %v219, %v543
        %v588 = vmul.f32 %v220, %v549
        %v589 = vmul.f32 %v221, %v549
        %v590 = vmul.f32 %v222, %v555
        %v591 = vmul.f32 %v223, %v555
        %v592 = vmul.f32 %v224, %v561
        %v593 = vmul.f32 %v225, %v561
        %594 = vst [vmem:[%s191] sm:$0xff] %v562
        %595 = vst [vmem:[%s191 + $0x8] sm:$0xff] %v563
        %596 = vst [vmem:[%s191 + $0x10] sm:$0xff] %v564
        %597 = vst [vmem:[%s191 + $0x18] sm:$0xff] %v565
        %598 = vst [vmem:[%s191 + $0x20] sm:$0xff] %v566
        %599 = vst [vmem:[%s191 + $0x28] sm:$0xff] %v567
        %600 = vst [vmem:[%s191 + $0x30] sm:$0xff] %v568
        %601 = vst [vmem:[%s191 + $0x38] sm:$0xff] %v569
        %602 = vst [vmem:[%s191 + $0x40] sm:$0xff] %v570
        %603 = vst [vmem:[%s191 + $0x48] sm:$0xff] %v571
        %604 = vst [vmem:[%s191 + $0x50] sm:$0xff] %v572
        %605 = vst [vmem:[%s191 + $0x58] sm:$0xff] %v573
        %606 = vst [vmem:[%s191 + $0x60] sm:$0xff] %v574
        %607 = vst [vmem:[%s191 + $0x68] sm:$0xff] %v575
        %608 = vst [vmem:[%s191 + $0x70] sm:$0xff] %v576
        %609 = vst [vmem:[%s191 + $0x78] sm:$0xff] %v577
        %610 = vst [vmem:[%s191 + $0x80] sm:$0xff] %v578
        %611 = vst [vmem:[%s191 + $0x88] sm:$0xff] %v579
        %612 = vst [vmem:[%s191 + $0x90] sm:$0xff] %v580
        %613 = vst [vmem:[%s191 + $0x98] sm:$0xff] %v581
        %614 = vst [vmem:[%s191 + $0xa0] sm:$0xff] %v582
        %615 = vst [vmem:[%s191 + $0xa8] sm:$0xff] %v583
        %616 = vst [vmem:[%s191 + $0xb0] sm:$0xff] %v584
        %617 = vst [vmem:[%s191 + $0xb8] sm:$0xff] %v585
        %618 = vst [vmem:[%s191 + $0xc0] sm:$0xff] %v586
        %619 = vst [vmem:[%s191 + $0xc8] sm:$0xff] %v587
        %620 = vst [vmem:[%s191 + $0xd0] sm:$0xff] %v588
        %621 = vst [vmem:[%s191 + $0xd8] sm:$0xff] %v589
        %622 = vst [vmem:[%s191 + $0xe0] sm:$0xff] %v590
        %623 = vst [vmem:[%s191 + $0xe8] sm:$0xff] %v591
        %624 = vst [vmem:[%s191 + $0xf0] sm:$0xff] %v592
        %625 = vst [vmem:[%s191 + $0xf8] sm:$0xff] %v593
        %s626 = sand.u32 %s96, 1
        %s627 = scalar_lea.sflag [#allocation4], %s626
        %s628 = sand.u32 %s96, 1
        %s629 = smul.addr %s628, 256
        %s630 = scalar_lea.vmem [#allocation5], %s629
        // Predicated region
        $region37: #{tpu_custom_call.1} parent=31 // pred_check
          %p631 = pneg %p106
        $region38: #{tpu_custom_call.1} parent=31 // pred_check_branch
          %633 = sbr.rel (%p631) target = $region40
        $region39: #{tpu_custom_call.1} parent=31 // pred_region
          %s634 = smul.u32 2, %s20
          %636 = vsyncadd %s627, 0
          %s637 = smul.addr %s634, 16
          %s638 = smul.addr %s637, 8
          %s639 = scalar_lea.hbm %s3, %s638
          %s640 = sshll.u32 %s630, 4
          %s641 = int_to_ptr.vmem [resolvable:$true] %s640
          %s642 = sshll.u32 %s639, 4
          %s643 = int_to_ptr.hbm [resolvable:$true] %s642
          %648 = dma.vmem_to_hbm [thread:$0]  %s641, 4096, %s643, %s627, 256, 256, 16
        $region40: #{tpu_custom_call.1} parent=31 // pred_fallthru
          _
      $region32: #{tpu_custom_call.1} parent=5 // pred_fallthru
        _
      %p649 = scmp.le.s32.totalorder 2, %s15
      // Predicated region
      $region41: #{tpu_custom_call.1} parent=5 // pred_check
        %p650 = pneg %p649
      $region42: #{tpu_custom_call.1} parent=5 // pred_check_branch
        %652 = sbr.rel (%p650) target = $region44
      $region43: #{tpu_custom_call.1} parent=5 // pred_region
        %s653 = ssub.s32 %s15, 2
        // Predicated region
        $region45: #{tpu_custom_call.1} parent=43 // pred_check
          %p654 = pneg %p112
        $region46: #{tpu_custom_call.1} parent=43 // pred_check_branch
          %656 = sbr.rel (%p654) target = $region48
        $region47: #{tpu_custom_call.1} parent=43 // pred_region
          %s657 = sand.u32 %s97, 1
          %s658 = scalar_lea.sflag [#allocation4], %s657
          %s659 = sand.u32 %s97, 1
          %s660 = smul.addr %s659, 256
          %s661 = scalar_lea.vmem [#allocation5], %s660
          %663 = dma.done %s658, 4096
        $region48: #{tpu_custom_call.1} parent=43 // pred_fallthru
          _
      $region44: #{tpu_custom_call.1} parent=5 // pred_fallthru
        _
    $region6: #{tpu_custom_call.1} parent=1 // loop_footer
      %s19 = sadd.s32 1, %s15
    $region7: #{tpu_custom_call.1} parent=1 // loop_footer_branch
      %14 = sbr.rel target = $region3
    $region8: #{tpu_custom_call.1} parent=1 // loop_exit
      _
    %664 = vsyncpa [#allocation3], 1
    %s665 = scalar_lea.sflag [#allocation3], 1
    %666 = vsyncpa %s665, 1
    %667 = vsyncpa [#allocation4], 1
    %s668 = scalar_lea.sflag [#allocation4], 1
    %669 = vsyncpa %s668, 1

</llo_original>
